<compile_context>
chip_gen: v7x
topology: tpu7x:2x2x1
jax: 0.10.0
libtpu: 0.0.40
codegen_flags: <defaults>
</compile_context>

<pallas_src>
import functools

import jax
import jax.numpy as jnp
from jax.experimental import pallas as pl
from jax.experimental.pallas import tpu as pltpu

ALPHA = 1.0
GAMMA = 2.0

TC = 128          # lanes (fixed fast axis)
TR_MAX = 4096     # max sublane rows per block: (4096,128) f32 = 2 MiB/stream/buffer
ROW_ALIGN = 16    # row alignment: legal tile for both f32 (8,128) and bf16 (16,128)


def _round_up(v, m):
    return ((v + m - 1) // m) * m


def _ipow(v, g):
    """Power with small integer exponent as repeated multiply (no exp/log pow)."""
    gi = int(g)
    if gi == g and gi >= 0:
        if gi == 0:
            return jnp.ones_like(v)
        out = v
        for _ in range(gi - 1):
            out = out * v
        return out
    return v ** g


def _focal_kernel(x_ref, t_ref, out_ref, *, alpha, gamma, mask_last,
                  valid_rows_last, valid_elems_last):
    """One (block_rows, 128) tile of logits/targets -> one (8, 128) partial sum."""
    x = x_ref[...].astype(jnp.float32)
    t = t_ref[...].astype(jnp.float32)

    # Numerically stable log-sigmoid pieces: one exp + one log per element.
    e = jnp.exp(-x)
    p = 1.0 / (1.0 + e)              # sigmoid(x).  (approx recip would be ~5-10%
    log_p = -jnp.log(1.0 + e)        #  on v7x but breaks the 1e-5 parity check.)

    loss = (-alpha) * _ipow(1.0 - p, gamma) * t * log_p
    if (1.0 - alpha) != 0.0:         # dead-coded at trace time for alpha == 1
        log_1mp = log_p - x          # log(1 - sigmoid(x)), stable
        loss = loss - (1.0 - alpha) * _ipow(p, gamma) * (1.0 - t) * log_1mp

    tr, tc = loss.shape

    def _store(val):
        # (block_rows, 128) -> (8, 128) partial sums; layout-preserving reshape.
        out_ref[...] = jnp.sum(val.reshape(tr // 8, 8, tc), axis=0)

    if mask_last:
        # Only the last block can read rows past the (padded) array; mask it there
        # and keep every other grid step on the plain unmasked reduce+store path.
        is_last = pl.program_id(0) == pl.num_programs(0) - 1

        @pl.when(jnp.logical_not(is_last))
        def _():
            _store(loss)

        @pl.when(is_last)
        def _():
            row = jax.lax.broadcasted_iota(jnp.int32, (tr, tc), 0)
            if alpha == 1.0:
                # Zero-padded in-array elements already contribute 0; only rows
                # beyond the array (OOB garbage) must be dropped.
                keep = row < valid_rows_last
            else:
                col = jax.lax.broadcasted_iota(jnp.int32, (tr, tc), 1)
                keep = (row * tc + col) < valid_elems_last
            _store(jnp.where(keep, loss, 0.0))
    else:
        _store(loss)


@jax.jit
def focal_loss(inputs, targets):
    """Pallas implementation of FocalLoss(alpha=1, gamma=2).forward."""
    x = inputs.reshape(-1)
    t = targets.reshape(-1)
    n = x.shape[0]

    # Pad (only if needed, decided at trace time) to a multiple of 16*128 so the
    # flat data can be viewed as (rows, 128) with rows a multiple of ROW_ALIGN.
    align = ROW_ALIGN * TC
    pad = (-n) % align
    if pad:
        x = jnp.pad(x, (0, pad))
        t = jnp.pad(t, (0, pad))
    rows = (n + pad) // TC

    x2 = x.reshape(rows, TC)
    t2 = t.reshape(rows, TC)

    # Block rows: as large as possible (amortize per-step overhead), but no more
    # than ~half the rows so inputs with >= 2 row-tiles give both v7x cores work.
    tr = min(TR_MAX, max(ROW_ALIGN, _round_up((rows + 1) // 2, ROW_ALIGN)))
    nblocks = (rows + tr - 1) // tr
    covered_rows = nblocks * tr
    valid_rows_last = rows - (nblocks - 1) * tr            # rows of real data in last block
    valid_elems_last = n - (nblocks - 1) * tr * TC         # only used when alpha != 1

    if ALPHA == 1.0:
        mask_last = covered_rows != rows                   # last block reads OOB rows
    else:
        mask_last = covered_rows * TC != n                 # pad or OOB must be masked

    kernel = functools.partial(
        _focal_kernel,
        alpha=ALPHA, gamma=GAMMA, mask_last=mask_last,
        valid_rows_last=valid_rows_last, valid_elems_last=valid_elems_last)

    x_spec = pl.BlockSpec((tr, TC), lambda i: (i, 0))
    t_spec = pl.BlockSpec((tr, TC), lambda i: (i, 0))

    n_padded = rows * TC
    cost = pl.CostEstimate(
        flops=12 * n_padded,
        transcendentals=2 * n_padded,
        bytes_accessed=(x2.size * x2.dtype.itemsize
                        + t2.size * t2.dtype.itemsize
                        + nblocks * 8 * TC * 4),
    )

    partials = pl.pallas_call(
        kernel,
        out_shape=jax.ShapeDtypeStruct((nblocks * 8, TC), jnp.float32),
        grid_spec=pltpu.PrefetchScalarGridSpec(
            num_scalar_prefetch=0,
            grid=(nblocks,),
            in_specs=[x_spec, t_spec],
            out_specs=pl.BlockSpec((8, TC), lambda i: (i, 0)),
        ),
        compiler_params=pltpu.CompilerParams(
            dimension_semantics=("parallel",),          # per-block outputs: fully parallel
            vmem_limit_bytes=32 * 1024 * 1024,          # v5e guardrail for the 4096-row tiles
        ),
        cost_estimate=cost,
    )(x2, t2)

    return jnp.sum(partials) / jnp.float32(n)            # focal_loss.mean()


def _reference(inputs, targets):
    p = jax.nn.sigmoid(inputs.reshape(-1).astype(jnp.float32))
    t = targets.reshape(-1).astype(jnp.float32)
    loss = (-ALPHA) * (1.0 - p) ** GAMMA * t * jnp.log(p) \
           - (1.0 - ALPHA) * p ** GAMMA * (1.0 - t) * jnp.log(1.0 - p)
    return loss.mean()


if __name__ == "__main__":
    key = jax.random.PRNGKey(0)
    k1, k2, k3, k4, k5, k6 = jax.random.split(key, 6)

    # Primary: NCHW-style logits and binary targets, small shapes.
    x = jax.random.normal(k1, (2, 4, 16, 16), dtype=jnp.float32)
    t = (jax.random.uniform(k2, (2, 4, 16, 16)) > 0.5).astype(jnp.float32)
    out = jax.block_until_ready(focal_loss(x, t))
    ref = _reference(x, t)
    assert jnp.allclose(out, ref, rtol=1e-5, atol=1e-6), (out, ref)

    # Same data with bf16 targets (0/1 exact): halves target-stream HBM reads.
    out_bf = jax.block_until_ready(focal_loss(x, t.astype(jnp.bfloat16)))
    assert jnp.allclose(out_bf, ref, rtol=1e-5, atol=1e-6), (out_bf, ref)

    # Ragged size (not a multiple of 16*128): exercises the trace-time pad branch.
    xr = jax.random.normal(k3, (2, 3, 7, 11), dtype=jnp.float32)
    tr_ = (jax.random.uniform(k4, (2, 3, 7, 11)) > 0.5).astype(jnp.float32)
    out_r = jax.block_until_ready(focal_loss(xr, tr_))
    ref_r = _reference(xr, tr_)
    assert jnp.allclose(out_r, ref_r, rtol=1e-5, atol=1e-6), (out_r, ref_r)

    # Multi-block case whose last block extends past the array rows: exercises the
    # pl.when-gated last-block mask (1040 rows, tr = 528 -> 2 blocks, 16 OOB rows).
    xb = jax.random.normal(k5, (2, 4, 130, 128), dtype=jnp.float32)
    tb = (jax.random.uniform(k6, (2, 4, 130, 128)) > 0.5).astype(jnp.float32)
    out_b = jax.block_until_ready(focal_loss(xb, tb))
    ref_b = _reference(xb, tb)
    assert jnp.allclose(out_b, ref_b, rtol=1e-5, atol=1e-6), (out_b, ref_b)

    print("KERNEL_OK")
</pallas_src>

<mosaic_0001>
module attributes {stable_mosaic.version = 11 : i64} {
  func.func @_focal_kernel(%arg0: i32, %arg1: memref<16x128xf32, #tpu.memory_space<vmem>>, %arg2: memref<16x128xf32, #tpu.memory_space<vmem>>, %arg3: memref<8x128xf32, #tpu.memory_space<vmem>>) attributes {dimension_semantics = [#tpu.dimension_semantics<parallel>], iteration_bounds = array<i64: 1>, scalar_prefetch = 0 : i64, scratch_operands = 0 : i64, tpu.core_type = #tpu.core_type<tc>, window_params = [{transform_indices = @transform_0, window_bounds = array<i64: 16, 128>}, {transform_indices = @transform_1, window_bounds = array<i64: 16, 128>}, {transform_indices = @transform_2, window_bounds = array<i64: 8, 128>}]} {
    %c0 = arith.constant 0 : index
    %c0_0 = arith.constant 0 : index
    %0 = vector.load %arg1[%c0, %c0_0] : memref<16x128xf32, #tpu.memory_space<vmem>>, vector<16x128xf32>
    %c0_1 = arith.constant 0 : index
    %c0_2 = arith.constant 0 : index
    %1 = vector.load %arg2[%c0_1, %c0_2] : memref<16x128xf32, #tpu.memory_space<vmem>>, vector<16x128xf32>
    %cst = arith.constant 0.000000e+00 : f32
    %2 = vector.broadcast %cst : f32 to vector<16x128xf32>
    %3 = arith.subf %2, %0 : vector<16x128xf32>
    %4 = math.exp %3 : vector<16x128xf32>
    %cst_3 = arith.constant 1.000000e+00 : f32
    %5 = vector.broadcast %cst_3 : f32 to vector<16x128xf32>
    %6 = arith.addf %5, %4 : vector<16x128xf32>
    %cst_4 = arith.constant 1.000000e+00 : f32
    %7 = vector.broadcast %cst_4 : f32 to vector<16x128xf32>
    %8 = arith.divf %7, %6 : vector<16x128xf32>
    %cst_5 = arith.constant 1.000000e+00 : f32
    %9 = vector.broadcast %cst_5 : f32 to vector<16x128xf32>
    %10 = arith.addf %9, %4 : vector<16x128xf32>
    %11 = math.log %10 : vector<16x128xf32>
    %cst_6 = arith.constant 0.000000e+00 : f32
    %12 = vector.broadcast %cst_6 : f32 to vector<16x128xf32>
    %13 = arith.subf %12, %11 : vector<16x128xf32>
    %cst_7 = arith.constant 1.000000e+00 : f32
    %14 = vector.broadcast %cst_7 : f32 to vector<16x128xf32>
    %15 = arith.subf %14, %8 : vector<16x128xf32>
    %16 = arith.mulf %15, %15 : vector<16x128xf32>
    %cst_8 = arith.constant -1.000000e+00 : f32
    %17 = vector.broadcast %cst_8 : f32 to vector<16x128xf32>
    %18 = arith.mulf %17, %16 : vector<16x128xf32>
    %19 = arith.mulf %18, %1 : vector<16x128xf32>
    %20 = arith.mulf %19, %13 : vector<16x128xf32>
    %21 = vector.shape_cast %20 : vector<16x128xf32> to vector<2x8x128xf32>
    %cst_9 = arith.constant dense<0.000000e+00> : vector<8x128xf32>
    %22 = vector.multi_reduction <add>, %21, %cst_9 [0] : vector<2x8x128xf32> to vector<8x128xf32>
    %c0_10 = arith.constant 0 : index
    %c0_11 = arith.constant 0 : index
    %23 = vector.load %arg3[%c0_10, %c0_11] : memref<8x128xf32, #tpu.memory_space<vmem>>, vector<8x128xf32>
    tpu.vector_store %arg3[%c0_10, %c0_11], %22 {strides = array<i32>} : memref<8x128xf32, #tpu.memory_space<vmem>>, vector<8x128xf32>,
    return
  }
  func.func @transform_0(%arg0: i32) -> (i32, i32) {
    %c0_i32 = arith.constant 0 : i32
    %c0_i32_0 = arith.constant 0 : i32
    return %arg0, %c0_i32 : i32, i32
  }
  func.func @transform_1(%arg0: i32) -> (i32, i32) {
    %c0_i32 = arith.constant 0 : i32
    %c0_i32_0 = arith.constant 0 : i32
    return %arg0, %c0_i32 : i32, i32
  }
  func.func @transform_2(%arg0: i32) -> (i32, i32) {
    %c0_i32 = arith.constant 0 : i32
    %c0_i32_0 = arith.constant 0 : i32
    return %arg0, %c0_i32 : i32, i32
  }
}

</mosaic_0001>

<llo_original>
// kernel: focal_loss.1
$region0: #{focal_loss.1}
  #allocation0 [shape = 'u32[]', space=smem, size = 0x4, offset = 0x4, fixed_abs, tag = 'smem constant byte address 0x4 - core index']
  #allocation1 [shape = 'u32[144,128]{1,0:T(1,128)}', space=vmem, size = 0x12000, scoped, tag = 'internal scratch']
  %s0 = inlined_call_operand.vmem [shape: f32[16,128], index: 0, kind: input, shape index: {}]
  %s1 = inlined_call_operand.vmem [shape: f32[16,128], index: 1, kind: input, shape index: {}]
  %s2 = inlined_call_operand.vmem [shape: f32[8,128], index: 2, kind: output, shape index: {}]
  %s3 = sld [smem:[#allocation0]]
  $region18: #{focal_loss.1} parent=0
    _
  %s5 = ssub.s32 1, %s3
  %s6 = scalar_select 0, %s5, %s3
  // Predicated region
  $region2: #{focal_loss.1} parent=0 // pred_check
    _
  $region3: #{focal_loss.1} parent=0 // pred_check_branch
    %8 = sbr.rel (0) target = $region5
  $region4: #{focal_loss.1} parent=0 // pred_region
    _
  $region5: #{focal_loss.1} parent=0 // pred_fallthru
    _
  // Predicated region
  $region6: #{focal_loss.1} parent=0 // pred_check
    _
  $region7: #{focal_loss.1} parent=0 // pred_check_branch
    %10 = sbr.rel (0) target = $region9
  $region8: #{focal_loss.1} parent=0 // pred_region
    _
  $region9: #{focal_loss.1} parent=0 // pred_fallthru
    _
  %v11 = vld [vmem:[%s0] sm:$0xff]
  %v12 = vld [vmem:[%s0 + $0x8] sm:$0xff]
  %v13 = vld [vmem:[%s1] sm:$0xff]
  %v14 = vld [vmem:[%s1 + $0x8] sm:$0xff]
  %v15 = vsub.f32 0.0, %v11
  %v16 = vsub.f32 0.0, %v12
  %v17 = vmul.f32 %v15, 1.442695
  %v18 = vpow.pop %v17
  %v19 = vmul.f32 %v16, 1.442695
  %v20 = vpow.pop %v19
  %v21 = vadd.f32 %v18, 1.0
  %v22 = vadd.f32 %v20, 1.0
  %v23 = vrcp.pop %v21
  %v24 = vmul.f32 1.0, %v23
  %v25 = vrcp.pop %v22
  %v26 = vmul.f32 1.0, %v25
  %v27 = vlog2.pop %v21
  %v28 = vmul.f32 %v27, 0.6931472
  %v29 = vlog2.pop %v22
  %v30 = vmul.f32 %v29, 0.6931472
  %v31 = vsub.f32 0.0, %v28
  %v32 = vsub.f32 0.0, %v30
  %v33 = vsub.f32 1.0, %v24
  %v34 = vsub.f32 1.0, %v26
  %v35 = vmul.f32 %v33, %v33
  %v36 = vmul.f32 %v34, %v34
  %v37 = vmul.f32 %v35, -1.0
  %v38 = vmul.f32 %v36, -1.0
  %v39 = vmul.f32 %v37, %v13
  %v40 = vmul.f32 %v38, %v14
  %v41 = vmul.f32 %v39, %v31
  %v42 = vmul.f32 %v40, %v32
  %v43 = vadd.f32 %v41, %v42
  %44 = vst [vmem:[%s2] sm:$0xff] %v43
  // Predicated region
  $region10: #{focal_loss.1} parent=0 // pred_check
    _
  $region11: #{focal_loss.1} parent=0 // pred_check_branch
    %46 = sbr.rel (0) target = $region13
  $region12: #{focal_loss.1} parent=0 // pred_region
    _
  $region13: #{focal_loss.1} parent=0 // pred_fallthru
    _
  // Predicated region
  $region14: #{focal_loss.1} parent=0 // pred_check
    _
  $region15: #{focal_loss.1} parent=0 // pred_check_branch
    %48 = sbr.rel (0) target = $region17
  $region16: #{focal_loss.1} parent=0 // pred_region
    _
  $region17: #{focal_loss.1} parent=0 // pred_fallthru
    _

</llo_original>
